<compile_context>
chip_gen: v7x
topology: tpu7x:2x2x1
jax: 0.10.0
libtpu: 0.0.40
codegen_flags: <defaults>
</compile_context>

<pallas_src>
import jax
import jax.numpy as jnp
from jax.experimental import pallas as pl
from jax.experimental.pallas import tpu as pltpu

IN_FEATURES = 40
OUT_FEATURES = 30
_LANES = 128


def _round_up(n, m):
    return ((n + m - 1) // m) * m


def nest_mlp_kernel(x_ref, w_ref, b_ref, o_ref):
    # MXU matmul with f32 accumulation, then bias add + ReLU on the f32 VPU.
    y = jnp.dot(x_ref[...], w_ref[...], preferred_element_type=jnp.float32)
    y = y + b_ref[...]                      # (TILE_B, 30) + (1, 30) broadcast
    o_ref[...] = jnp.maximum(y, 0.0).astype(o_ref.dtype)


def nest_mlp(x, w, b, *, tile_b=8192, out_dtype=jnp.float32, core_parallel=False):
    """relu(x @ w + b).

    x: (B, 40) in float32 or bfloat16 (streamed as-is: no wrapper-side cast).
    w: (40, 30), b: (30,).  Returns (B, 30) in `out_dtype` (default float32).
    core_parallel=True uses pltpu.CORE_PARALLEL on the batch axis (v7x 2-TC
    sharding); keep the grid >= 2 steps in that case.
    """
    B = x.shape[0]
    assert x.shape[1] == IN_FEATURES and w.shape == (IN_FEATURES, OUT_FEATURES)

    xk = x                                   # stream in the producer's dtype
    # W is tiny and VMEM-resident; matching x's dtype keeps the MXU operands
    # uniform (bf16 x bf16 or f32 x f32) at negligible cost.
    wk = w if w.dtype == xk.dtype else w.astype(xk.dtype)
    b2d = b.reshape(1, OUT_FEATURES).astype(jnp.float32)

    # Sublane alignment: 8 rows for f32, 16 for packed (bf16) inputs.
    sublane = 16 if xk.dtype.itemsize < 4 else 8

    # Only pad B up to the next sublane multiple (<= 15 rows).  Tile
    # raggedness is handled by the cdiv grid + masked edge writes, so no
    # full-copy jnp.pad of x.
    B_sub = _round_up(B, sublane)
    if B_sub != B:
        xk = jnp.pad(xk, ((0, B_sub - B), (0, 0)))

    eff_tile = min(_round_up(tile_b, sublane), B_sub)
    grid = (pl.cdiv(B_sub, eff_tile),)

    # Explicit VMEM budget: x / out tiles pad 40/30 -> 128 lanes in VMEM and
    # are double-buffered; W and bias are small constants.
    out_itemsize = jnp.dtype(out_dtype).itemsize
    vmem_est = eff_tile * _LANES * (2 * xk.dtype.itemsize + 2 * out_itemsize)
    vmem_est += 2 * _round_up(IN_FEATURES, 8) * _LANES * wk.dtype.itemsize
    vmem_est += 2 * 8 * _LANES * 4
    vmem_limit = int(min(max(int(vmem_est * 1.5) + (4 << 20), 32 << 20), 48 << 20))

    batch_sem = pltpu.CORE_PARALLEL if core_parallel else "parallel"

    out = pl.pallas_call(
        nest_mlp_kernel,
        out_shape=jax.ShapeDtypeStruct((B_sub, OUT_FEATURES), out_dtype),
        grid=grid,
        in_specs=[
            # Streaming x: tiled over the batch, default double buffering.
            pl.BlockSpec((eff_tile, IN_FEATURES), lambda i: (i, 0)),
            # W and bias: constant index_map -> fetched once, VMEM-resident.
            pl.BlockSpec((IN_FEATURES, OUT_FEATURES), lambda i: (0, 0)),
            pl.BlockSpec((1, OUT_FEATURES), lambda i: (0, 0)),
        ],
        out_specs=pl.BlockSpec((eff_tile, OUT_FEATURES), lambda i: (i, 0)),
        compiler_params=pltpu.CompilerParams(
            dimension_semantics=(batch_sem,),
            vmem_limit_bytes=vmem_limit,
        ),
    )(xk, wk, b2d)

    return out[:B] if B_sub != B else out


def reference(x, w, b):
    return jnp.maximum(
        x.astype(jnp.float32) @ w.astype(jnp.float32)
        + b[None, :].astype(jnp.float32), 0.0)


if __name__ == "__main__":
    key = jax.random.PRNGKey(0)
    kx, kw, kb, kx2 = jax.random.split(key, 4)

    # Deterministic params (mimic PyTorch Linear uniform(-1/sqrt(in), 1/sqrt(in))).
    bound = 1.0 / (IN_FEATURES ** 0.5)
    w = jax.random.uniform(kw, (IN_FEATURES, OUT_FEATURES),
                           minval=-bound, maxval=bound, dtype=jnp.float32)
    b = jax.random.uniform(kb, (OUT_FEATURES,),
                           minval=-bound, maxval=bound, dtype=jnp.float32)

    # --- Case 1: small batch (B=8), f32 path, single grid step -------------
    B = 8
    x = jax.random.normal(kx, (B, IN_FEATURES), dtype=jnp.float32)
    out = jax.block_until_ready(nest_mlp(x, w, b))
    ref = reference(x, w, b)
    assert out.shape == (B, OUT_FEATURES) and out.dtype == jnp.float32
    assert jnp.allclose(out, ref, atol=1e-5, rtol=1e-5)

    # --- Case 2: non-tile-multiple batch -> ragged cdiv grid, no wrapper pad
    B2 = 200
    x2 = jax.random.normal(kx2, (B2, IN_FEATURES), dtype=jnp.float32)
    ref2 = reference(x2, w, b)
    out2 = jax.block_until_ready(nest_mlp(x2, w, b, tile_b=64))
    assert out2.shape == (B2, OUT_FEATURES)
    assert jnp.allclose(out2, ref2, atol=1e-5, rtol=1e-5)

    # --- Case 3: producer already emits bf16 -> kernel streams bf16 as-is --
    out3 = jax.block_until_ready(nest_mlp(x2.astype(jnp.bfloat16), w, b, tile_b=64))
    assert out3.shape == (B2, OUT_FEATURES)
    assert jnp.allclose(out3, ref2, atol=3e-2, rtol=3e-2)

    # --- Case 4: bf16 output (halves write traffic if consumer tolerates it)
    out4 = jax.block_until_ready(nest_mlp(x2, w, b, out_dtype=jnp.bfloat16))
    assert out4.shape == (B2, OUT_FEATURES) and out4.dtype == jnp.bfloat16
    assert jnp.allclose(out4.astype(jnp.float32), ref2, atol=3e-2, rtol=3e-2)

    print("KERNEL_OK")
</pallas_src>

<mosaic_0001>
module attributes {stable_mosaic.version = 11 : i64} {
  func.func @nest_mlp_kernel(%arg0: i32, %arg1: memref<8x40xf32, #tpu.memory_space<vmem>>, %arg2: memref<40x30xf32, #tpu.memory_space<vmem>>, %arg3: memref<1x30xf32, #tpu.memory_space<vmem>>, %arg4: memref<8x30xf32, #tpu.memory_space<vmem>>) attributes {dimension_semantics = [#tpu.dimension_semantics<parallel>], iteration_bounds = array<i64: 1>, scalar_prefetch = 0 : i64, scratch_operands = 0 : i64, tpu.core_type = #tpu.core_type<tc>, window_params = [{transform_indices = @transform_0, window_bounds = array<i64: 8, 40>}, {pipeline_mode = #tpu.pipeline_mode<synchronous>, transform_indices = @transform_1, window_bounds = array<i64: 40, 30>}, {pipeline_mode = #tpu.pipeline_mode<synchronous>, transform_indices = @transform_2, window_bounds = array<i64: 1, 30>}, {transform_indices = @transform_3, window_bounds = array<i64: 8, 30>}]} {
    %c0 = arith.constant 0 : index
    %c0_0 = arith.constant 0 : index
    %0 = vector.load %arg1[%c0, %c0_0] : memref<8x40xf32, #tpu.memory_space<vmem>>, vector<8x40xf32>
    %c0_1 = arith.constant 0 : index
    %c0_2 = arith.constant 0 : index
    %1 = vector.load %arg2[%c0_1, %c0_2] : memref<40x30xf32, #tpu.memory_space<vmem>>, vector<40x30xf32>
    %cst = arith.constant dense<0.000000e+00> : vector<8x30xf32>
    %2 = tpu.matmul %0, %1, %cst {dimension_numbers = #tpu.dot_dimension_numbers<[1], [0], [0], [1], [0, 0, 1, 1], [], []>} : vector<8x40xf32>, vector<40x30xf32>, vector<8x30xf32> -> vector<8x30xf32>
    %c0_3 = arith.constant 0 : index
    %c0_4 = arith.constant 0 : index
    %3 = vector.load %arg3[%c0_3, %c0_4] : memref<1x30xf32, #tpu.memory_space<vmem>>, vector<1x30xf32>
    %4 = vector.broadcast %3 : vector<1x30xf32> to vector<8x30xf32>
    %5 = arith.addf %2, %4 : vector<8x30xf32>
    %cst_5 = arith.constant 0.000000e+00 : f32
    %6 = vector.broadcast %cst_5 : f32 to vector<8x30xf32>
    %7 = arith.maximumf %5, %6 : vector<8x30xf32>
    %c0_6 = arith.constant 0 : index
    %c0_7 = arith.constant 0 : index
    %8 = vector.load %arg4[%c0_6, %c0_7] : memref<8x30xf32, #tpu.memory_space<vmem>>, vector<8x30xf32>
    tpu.vector_store %arg4[%c0_6, %c0_7], %7 {strides = array<i32>} : memref<8x30xf32, #tpu.memory_space<vmem>>, vector<8x30xf32>,
    return
  }
  func.func @transform_0(%arg0: i32) -> (i32, i32) {
    %c0_i32 = arith.constant 0 : i32
    %c0_i32_0 = arith.constant 0 : i32
    return %arg0, %c0_i32 : i32, i32
  }
  func.func @transform_1(%arg0: i32) -> (i32, i32) {
    %c0_i32 = arith.constant 0 : i32
    %c0_i32_0 = arith.constant 0 : i32
    %c0_i32_1 = arith.constant 0 : i32
    return %c0_i32, %c0_i32_0 : i32, i32
  }
  func.func @transform_2(%arg0: i32) -> (i32, i32) {
    %c0_i32 = arith.constant 0 : i32
    %c0_i32_0 = arith.constant 0 : i32
    %c0_i32_1 = arith.constant 0 : i32
    return %c0_i32, %c0_i32_0 : i32, i32
  }
  func.func @transform_3(%arg0: i32) -> (i32, i32) {
    %c0_i32 = arith.constant 0 : i32
    %c0_i32_0 = arith.constant 0 : i32
    return %arg0, %c0_i32 : i32, i32
  }
}

</mosaic_0001>

<llo_original>
// kernel: tpu_custom_call.1
$region0: #{tpu_custom_call.1}
  #allocation0 [shape = 'u32[]', space=smem, size = 0x4, offset = 0x4, fixed_abs, tag = 'smem constant byte address 0x4 - core index']
  #allocation1 [shape = 'u32[144,128]{1,0:T(1,128)}', space=vmem, size = 0x12000, scoped, tag = 'internal scratch']
  %s0 = inlined_call_operand.vmem [shape: f32[8,40], index: 0, kind: input, shape index: {}]
  %s1 = inlined_call_operand.vmem [shape: f32[40,30], index: 1, kind: input, shape index: {}]
  %s2 = inlined_call_operand.vmem [shape: f32[1,30], index: 2, kind: input, shape index: {}]
  %s3 = inlined_call_operand.hbm [shape: f32[8,30], index: 3, kind: output, shape index: {}]
  %s4 = sld [smem:[#allocation0]]
  $region22: #{tpu_custom_call.1} parent=0
    _
  %s6 = ssub.s32 1, %s4
  %s7 = scalar_select 0, %s6, %s4
  $region1: #{tpu_custom_call.1} parent=0
    #allocation2 [shape = 'u8[4096]{0}', space=vmem, size = 0x1000, scoped, tag = 'output window, operand 0, single buffered']
    #allocation3 [shape = 's32[1]{0}', space=sflag, size = 0x4, scoped, tag = 'scoped memory for tpu_custom_call.1']
    %8 = vsyncpa [#allocation3], 0
    // Predicated region
    $region2: #{tpu_custom_call.1} parent=1 // pred_check
      _
    $region3: #{tpu_custom_call.1} parent=1 // pred_check_branch
      %10 = sbr.rel (0) target = $region5
    $region4: #{tpu_custom_call.1} parent=1 // pred_region
      _
    $region5: #{tpu_custom_call.1} parent=1 // pred_fallthru
      _
    // Predicated region
    $region6: #{tpu_custom_call.1} parent=1 // pred_check
      _
    $region7: #{tpu_custom_call.1} parent=1 // pred_check_branch
      %12 = sbr.rel (0) target = $region9
    $region8: #{tpu_custom_call.1} parent=1 // pred_region
      _
    $region9: #{tpu_custom_call.1} parent=1 // pred_fallthru
      _
    // Predicated region
    $region10: #{tpu_custom_call.1} parent=1 // pred_check
      _
    $region11: #{tpu_custom_call.1} parent=1 // pred_check_branch
      %14 = sbr.rel (0) target = $region13
    $region12: #{tpu_custom_call.1} parent=1 // pred_region
      _
    $region13: #{tpu_custom_call.1} parent=1 // pred_fallthru
      _
    %v15 = vld [vmem:[%s0] sm:$0xff]
    %v16 = vld [vmem:[%s1] sm:$0xff]
    %v17 = vld [vmem:[%s1 + $0x8] sm:$0xff]
    %v18 = vld [vmem:[%s1 + $0x10] sm:$0xff]
    %v19 = vld [vmem:[%s1 + $0x18] sm:$0xff]
    %v20 = vld [vmem:[%s1 + $0x20] sm:$0xff]
    %v21 = vld [vmem:[%s2] sm:$0x1]
    %v23 = vlaneseq
    %v24 = vshrl.u32 %v23, 7
    %v25 = vsub.s32 0, %v24
    %v26 = vrot.slane %v21, %v25
    %vm28 = vcmask 326656
    %v30 = vsel %vm28, %v15, 0
    %32 = vmatprep.subr.mxu0 0.0
    %33 = vmatpush1.msra.mxu0 %v16
    %34 = vmatprep.subr.mxu0 0.0
    %35 = vmatpush1.msra.mxu0 %v17
    %36 = vmatprep.subr.mxu0 0.0
    %37 = vmatpush1.msra.mxu0 %v18
    %38 = vmatprep.subr.mxu0 0.0
    %39 = vmatpush1.msra.mxu0 %v19
    %40 = vmatprep.subr.mxu0 0.0
    %41 = vmatpush1.msra.mxu0 %v20
    %42 = vmatprep.subr.mxu0 0.0
    %43 = vmatpush1.msra.mxu0 0.0
    %44 = vmatprep.subr.mxu0 0.0
    %45 = vmatpush1.msra.mxu0 0.0
    %46 = vmatprep.subr.mxu0 0.0
    %47 = vmatpush1.msra.mxu0 0.0
    %48 = vmatprep.subr.mxu0 0.0
    %49 = vmatpush1.msra.mxu0 0.0
    %50 = vmatprep.subr.mxu0 0.0
    %51 = vmatpush1.msra.mxu0 0.0
    %52 = vmatprep.subr.mxu0 0.0
    %53 = vmatpush1.msra.mxu0 0.0
    %54 = vmatprep.subr.mxu0 0.0
    %55 = vmatpush1.msra.mxu0 0.0
    %56 = vmatprep.subr.mxu0 0.0
    %57 = vmatpush1.msra.mxu0 0.0
    %58 = vmatprep.subr.mxu0 0.0
    %59 = vmatpush1.msra.mxu0 0.0
    %60 = vmatprep.subr.mxu0 0.0
    %61 = vmatpush1.msra.mxu0 0.0
    %62 = vmatprep.subr.mxu0 0.0
    %63 = vmatpush1.msra.mxu0 0.0
    %64 = vmatprep.subr.mxu0 0.0
    %65 = vmatpush1.msra.mxu0 0.0
    %66 = vmatprep.subr.mxu0 0.0
    %67 = vmatpush1.msra.mxu0 0.0
    %68 = vmatprep.subr.mxu0 0.0
    %69 = vmatpush1.msra.mxu0 0.0
    %70 = vmatprep.subr.mxu0 0.0
    %71 = vmatpush1.msra.mxu0 0.0
    %72 = vmatprep.subr.mxu0 0.0
    %73 = vmatpush1.msra.mxu0 0.0
    %74 = vmatprep.subr.mxu0 0.0
    %75 = vmatpush1.msra.mxu0 0.0
    %76 = vmatprep.subr.mxu0 0.0
    %77 = vmatpush1.msra.mxu0 0.0
    %78 = vmatprep.subr.mxu0 0.0
    %79 = vmatpush1.msra.mxu0 0.0
    %80 = vmatprep.subr.mxu0 0.0
    %81 = vmatpush1.msra.mxu0 0.0
    %82 = vmatprep.subr.mxu0 0.0
    %83 = vmatpush1.msra.mxu0 0.0
    %84 = vmatprep.subr.mxu0 0.0
    %85 = vmatpush1.msra.mxu0 0.0
    %86 = vmatprep.subr.mxu0 0.0
    %87 = vmatpush1.msra.mxu0 0.0
    %88 = vmatprep.subr.mxu0 0.0
    %89 = vmatpush1.msra.mxu0 0.0
    %90 = vmatprep.subr.mxu0 0.0
    %91 = vmatpush1.msra.mxu0 0.0
    %92 = vmatprep.subr.mxu0 0.0
    %93 = vmatpush1.msra.mxu0 0.0
    %94 = vmatprep.subr.mxu0 0.0
    %95 = vmatpush1.msra.mxu0 0.0
    %96 = vmatprep.mubr.f32.mxu0 0.0
    %97 = vmatmul.mubr.f32.gmra.mrb[0].mxu0 %v30
    %v98 = vpop.f32.mrb[0].mxu0
    %v99 = vadd.f32 %v26, %v98
    %v100 = vpop.f32.mrb[0].mxu0
    %101 = vdwg.mxu0
    %v102 = vmax.f32 %v99, 0.0
    %vm103 = vcmask 244736
    %104 = vst.msk [vmem:[#allocation2] sm:$0xff] %vm103, %v102
    // Predicated region
    $region14: #{tpu_custom_call.1} parent=1 // pred_check
      _
    $region15: #{tpu_custom_call.1} parent=1 // pred_check_branch
      %106 = sbr.rel (0) target = $region17
    $region16: #{tpu_custom_call.1} parent=1 // pred_region
      %s108 = ssub.s32 128, 128
      %109 = vsyncadd [#allocation3], %s108
      %s111 = sshll.u32 [#allocation2], 4
      %s112 = int_to_ptr.vmem [resolvable:$true] %s111
      %114 = dma.vmem_to_hbm [thread:$0]  %s112, 128, %s3, [#allocation3]
    $region17: #{tpu_custom_call.1} parent=1 // pred_fallthru
      _
    // Predicated region
    $region18: #{tpu_custom_call.1} parent=1 // pred_check
      _
    $region19: #{tpu_custom_call.1} parent=1 // pred_check_branch
      %116 = sbr.rel (0) target = $region21
    $region20: #{tpu_custom_call.1} parent=1 // pred_region
      %117 = dma.done [#allocation3], 128
    $region21: #{tpu_custom_call.1} parent=1 // pred_fallthru
      _
    %118 = vsyncpa [#allocation3], 1

</llo_original>
